<compile_context>
chip_gen: v5e
topology: v5e:2x2
jax: 0.10.0
libtpu: 0.0.40
codegen_flags: <defaults>
</compile_context>

<pallas_src>
import functools

import jax
import jax.numpy as jnp
from jax import lax
from jax.experimental import pallas as pl
from jax.experimental.pallas import tpu as pltpu


def _ceil_to(v: int, m: int) -> int:
    return ((v + m - 1) // m) * m


def _vmem_capacity_bytes() -> int:
    try:
        return int(pltpu.get_tpu_info().vmem_capacity_bytes)
    except Exception:
        return 64 * 1024 * 1024   # conservative (v7x-sized) fallback


def _pick_tiles(n: int, c: int, hw: int, budget_bytes: int,
                unroll_cap: int = 128):
    """Pick (t_n, t_hw, acc_w) for blocks of shape (t_n, c, t_hw).

    t_hw is a multiple-of-128 divisor of hw (or the full dim), as large as the
    padded-byte budget allows; t_n is a divisor of n grown to fill the budget,
    capped so the in-kernel static unroll (t_n * n_chunks) stays small; acc_w
    is the narrow-accumulator width (<= 8 lane chunks, ~512 wide when legal).
    """
    c_pad = _ceil_to(c, 8)

    def padded_bytes(tn, thw):
        return tn * c_pad * _ceil_to(thw, 128) * 4

    # ---- lane (HW) tile ----
    if hw % 128 == 0:
        cands = [t for t in range(128, hw + 1, 128) if hw % t == 0]
    else:
        cands = [hw]                       # full dim is always a legal block
    t_hw = cands[0]
    for t in cands:
        if padded_bytes(1, t) <= budget_bytes:
            t_hw = max(t_hw, t)

    # ---- narrow accumulator width ----
    acc_w = t_hw
    if t_hw % 128 == 0:
        for w in range(128, t_hw, 128):
            if t_hw % w == 0 and w >= 512 and t_hw // w <= 8:
                acc_w = w
                break
    n_chunks = t_hw // acc_w

    # ---- batch (N) tile folded into the block ----
    t_n = 1
    for t in range(1, n + 1):
        if n % t != 0:
            continue
        if padded_bytes(t, t_hw) <= budget_bytes and t * n_chunks <= unroll_cap:
            t_n = t
    return t_n, t_hw, acc_w


# ---------------------------------------------------------------------------
# Pass 1: per-channel sum / sum-of-squares reduction + folded scale/shift.
# Grid: (channel-split [parallel], N-tiles [arbitrary], HW-tiles [arbitrary]).
# ---------------------------------------------------------------------------
def _stats_kernel(x_ref, w_ref, b_ref,
                  mean_ref, var_ref, scale_ref, shift_ref,
                  sum_acc, sq_acc, *, inv_m, eps, acc_w, n_chunks):
    n = pl.program_id(1)
    k = pl.program_id(2)
    t_n = x_ref.shape[0]

    # Reduce the whole (t_n, t_c, t_hw) block into a narrow (t_c, acc_w)
    # register partial so the VMEM accumulators see one load+store per step
    # (~n_chunks x less accumulator vst traffic than full-width accumulators).
    ps = None
    pq = None
    for i in range(t_n):                       # static unroll (picker-bounded)
        for j in range(n_chunks):              # static lane-aligned slices
            c = x_ref[i, :, j * acc_w:(j + 1) * acc_w]
            if ps is None:
                ps, pq = c, c * c
            else:
                ps = ps + c
                pq = pq + c * c

    @pl.when((n == 0) & (k == 0))
    def _init():
        sum_acc[...] = ps
        sq_acc[...] = pq

    @pl.when((n > 0) | (k > 0))
    def _accumulate():
        sum_acc[...] += ps
        sq_acc[...] += pq

    @pl.when((n == pl.num_programs(1) - 1) & (k == pl.num_programs(2) - 1))
    def _finalize():
        s = jnp.sum(sum_acc[...], axis=1, keepdims=True)     # (t_c, 1)
        sq = jnp.sum(sq_acc[...], axis=1, keepdims=True)     # (t_c, 1)
        mean = s * inv_m
        # E[x^2]-E[x]^2 can cancel slightly negative in f32; clamp so sqrt
        # never sees a negative value.
        var = jnp.maximum(sq * inv_m - mean * mean, 0.0)
        # NOTE: module semantics are sqrt(var) + eps, NOT sqrt(var + eps).
        std = jnp.sqrt(var) + eps
        scale = w_ref[...] / std
        shift = b_ref[...] - mean * scale
        mean_ref[...] = mean
        var_ref[...] = var
        scale_ref[...] = scale
        shift_ref[...] = shift


# ---------------------------------------------------------------------------
# Pass 2: elementwise normalize  out = x * scale + shift  (lane-dense sweep).
# ---------------------------------------------------------------------------
def _normalize_kernel(x_ref, scale_ref, shift_ref, o_ref):
    scale = scale_ref[...]                 # (C, 1) lane-broadcast vs (C, t_hw)
    shift = shift_ref[...]
    for i in range(x_ref.shape[0]):        # static unroll over folded N tile
        o_ref[i] = x_ref[i] * scale + shift


# ---------------------------------------------------------------------------
# Fused fast path: whole x resident in VMEM -> 1 read + 1 write of x.
# ---------------------------------------------------------------------------
def _fused_kernel(x_ref, w_ref, b_ref, o_ref, mean_ref, var_ref,
                  sum2d, sq2d, *, inv_m, eps):
    n = x_ref.shape[0]
    x0 = x_ref[0]
    sum2d[...] = x0
    sq2d[...] = x0 * x0

    def _accum(i, carry):
        xi = x_ref[i]
        sum2d[...] += xi
        sq2d[...] += xi * xi
        return carry

    lax.fori_loop(1, n, _accum, 0)

    s = jnp.sum(sum2d[...], axis=1, keepdims=True)
    sq = jnp.sum(sq2d[...], axis=1, keepdims=True)
    mean = s * inv_m
    var = jnp.maximum(sq * inv_m - mean * mean, 0.0)
    std = jnp.sqrt(var) + eps              # sqrt(var) + eps, per the module
    scale = w_ref[...] / std
    shift = b_ref[...] - mean * scale
    mean_ref[...] = mean
    var_ref[...] = var

    def _normalize(i, carry):
        o_ref[i] = x_ref[i] * scale + shift
        return carry

    lax.fori_loop(0, n, _normalize, 0)


def my_batch_norm_2d(x, weights, bias, running_mean, running_var,
                     eps: float = 1e-5, momentum: float = 0.1, *,
                     force_two_pass: bool = False,
                     max_block_bytes: int | None = None):
    """Training-mode forward of MyBatchNorm2d.

    Args:
      x: (N, C, H, W) float32 (NCHW, same layout as PyTorch).
      weights, bias, running_mean, running_var: (C,) float32.
    Returns:
      out (N, C, H, W), new_running_mean (C,), new_running_var (C,)
    """
    N, C, H, W = x.shape
    HW = H * W
    M = N * HW
    x_bytes = 4 * N * C * HW

    # Free reshape only (no transpose): NCHW -> (N, C, H*W).
    x3 = x.reshape(N, C, HW).astype(jnp.float32)
    w_col = weights.reshape(C, 1).astype(jnp.float32)
    b_col = bias.reshape(C, 1).astype(jnp.float32)

    # Generation-aware budgets (v7x: 64 MiB VMEM -> 4 MiB blocks / 48 MiB
    # scoped limit; v5e/v6e: 128 MiB VMEM -> 8 MiB blocks / 64 MiB limit).
    vmem_cap = _vmem_capacity_bytes()
    if vmem_cap >= 100 * 1024 * 1024:
        vmem_limit = 64 * 1024 * 1024
        default_budget = 8 * 1024 * 1024
    else:
        vmem_limit = 48 * 1024 * 1024
        default_budget = 4 * 1024 * 1024
    budget = max_block_bytes if max_block_bytes is not None else default_budget

    col_shape = jax.ShapeDtypeStruct((C, 1), jnp.float32)
    inv_m = 1.0 / M

    # ---------------- fused fast path (x fully VMEM-resident) ----------------
    x_vmem_bytes = N * _ceil_to(C, 8) * _ceil_to(HW, 128) * 4
    use_fused = (not force_two_pass) and (x_vmem_bytes <= vmem_limit // 4)

    if use_fused:
        fused_kernel = functools.partial(_fused_kernel, inv_m=inv_m, eps=eps)
        out3, mean, var = pl.pallas_call(
            fused_kernel,
            out_shape=(jax.ShapeDtypeStruct((N, C, HW), jnp.float32),
                       col_shape, col_shape),
            grid=(1,),
            in_specs=[pl.BlockSpec((N, C, HW), lambda i: (0, 0, 0)),
                      pl.BlockSpec((C, 1), lambda i: (0, 0)),
                      pl.BlockSpec((C, 1), lambda i: (0, 0))],
            out_specs=(pl.BlockSpec((N, C, HW), lambda i: (0, 0, 0)),
                       pl.BlockSpec((C, 1), lambda i: (0, 0)),
                       pl.BlockSpec((C, 1), lambda i: (0, 0))),
            scratch_shapes=[pltpu.VMEM((C, HW), jnp.float32),
                            pltpu.VMEM((C, HW), jnp.float32)],
            compiler_params=pltpu.CompilerParams(
                dimension_semantics=("arbitrary",),
                vmem_limit_bytes=vmem_limit),
            cost_estimate=pl.CostEstimate(
                flops=5 * N * C * HW, transcendentals=C,
                bytes_accessed=2 * x_bytes),
        )(x3, w_col, b_col)
    else:
        # ---------------- two-pass path ----------------
        HWp = HW
        x3p = x3
        if HW % 128 != 0 and _ceil_to(C, 8) * _ceil_to(HW, 128) * 4 > budget:
            # Full-HW blocks would blow the VMEM budget (large C, awkward HW):
            # pad the spatial axis to a lane multiple so it can be tiled.
            # Zero padding is stats-neutral: mean/var divide by the true M.
            HWp = _ceil_to(HW, 128)
            x3p = jnp.pad(x3, ((0, 0), (0, 0), (0, HWp - HW)))

        t_n, t_hw, acc_w = _pick_tiles(N, C, HWp, budget)
        n_chunks = t_hw // acc_w
        n_n = N // t_n
        n_k = HWp // t_hw
        # Independent "parallel" channel axis so the stats reduction can be
        # split across v7x's two TensorCores (harmless on single-TC chips).
        n_c = 2 if (C >= 16 and C % 16 == 0) else 1
        t_c = C // n_c

        x_spec_p1 = pl.BlockSpec((t_n, t_c, t_hw), lambda c, n, k: (n, c, k))
        col_spec_p1 = pl.BlockSpec((t_c, 1), lambda c, n, k: (c, 0))

        stats_kernel = functools.partial(
            _stats_kernel, inv_m=inv_m, eps=eps, acc_w=acc_w, n_chunks=n_chunks)
        mean, var, scale, shift = pl.pallas_call(
            stats_kernel,
            out_shape=(col_shape, col_shape, col_shape, col_shape),
            grid=(n_c, n_n, n_k),
            in_specs=[x_spec_p1, col_spec_p1, col_spec_p1],
            out_specs=(col_spec_p1, col_spec_p1, col_spec_p1, col_spec_p1),
            scratch_shapes=[pltpu.VMEM((t_c, acc_w), jnp.float32),
                            pltpu.VMEM((t_c, acc_w), jnp.float32)],
            compiler_params=pltpu.CompilerParams(
                dimension_semantics=("parallel", "arbitrary", "arbitrary"),
                vmem_limit_bytes=vmem_limit),
            cost_estimate=pl.CostEstimate(
                flops=3 * N * C * HWp, transcendentals=C,
                bytes_accessed=x_bytes),
        )(x3p, w_col, b_col)

        x_spec_p2 = pl.BlockSpec((t_n, C, t_hw), lambda n, k: (n, 0, k))
        col_spec_p2 = pl.BlockSpec((C, 1), lambda n, k: (0, 0))
        out3p = pl.pallas_call(
            _normalize_kernel,
            out_shape=jax.ShapeDtypeStruct((N, C, HWp), jnp.float32),
            grid=(n_n, n_k),
            in_specs=[x_spec_p2, col_spec_p2, col_spec_p2],
            out_specs=x_spec_p2,
            compiler_params=pltpu.CompilerParams(
                dimension_semantics=("parallel", "parallel"),
                vmem_limit_bytes=vmem_limit),
            cost_estimate=pl.CostEstimate(
                flops=2 * N * C * HWp, transcendentals=0,
                bytes_accessed=2 * x_bytes),
        )(x3p, scale, shift)
        out3 = out3p if HWp == HW else out3p[:, :, :HW]

    out = out3.reshape(N, C, H, W)

    # Running-stat update (functional equivalent of the PyTorch buffer mutation).
    batch_mean = mean.reshape(C)
    batch_var = var.reshape(C)
    if M > 1:
        batch_var_unbiased = batch_var * (float(M) / float(M - 1))
    else:
        batch_var_unbiased = batch_var
    new_running_mean = (1.0 - momentum) * running_mean + momentum * batch_mean
    new_running_var = (1.0 - momentum) * running_var + momentum * batch_var_unbiased
    return out, new_running_mean, new_running_var


def _reference(x, weights, bias, eps=1e-5):
    # pure-JAX reference matching the PyTorch forward (training mode)
    mean = jnp.mean(x, axis=(0, 2, 3))
    var = jnp.mean((x - mean.reshape(1, -1, 1, 1)) ** 2, axis=(0, 2, 3))
    std = jnp.sqrt(var) + eps
    norm = (x - mean.reshape(1, -1, 1, 1)) / std.reshape(1, -1, 1, 1)
    return weights.reshape(1, -1, 1, 1) * norm + bias.reshape(1, -1, 1, 1)


if __name__ == "__main__":
    key = jax.random.PRNGKey(0)
    k1, k2, k3 = jax.random.split(key, 3)

    def _check(x, w, b, out, atol=1e-4, rtol=1e-4):
        ref = _reference(x, w, b)
        assert out.shape == x.shape
        err = float(jnp.max(jnp.abs(out - ref)))
        assert jnp.allclose(out, ref, atol=atol, rtol=rtol), err

    # ---- test 1: module's nominal small shape -> fused VMEM-resident path ----
    N, C, H, W = 2, 4, 16, 16
    x = jax.random.normal(k1, (N, C, H, W), dtype=jnp.float32)
    weights = jnp.ones((C,), dtype=jnp.float32)
    bias = jnp.zeros((C,), dtype=jnp.float32)
    running_mean = jnp.zeros((C,), dtype=jnp.float32)
    running_var = jnp.ones((C,), dtype=jnp.float32)

    out, new_rm, new_rv = my_batch_norm_2d(x, weights, bias,
                                           running_mean, running_var)
    jax.block_until_ready((out, new_rm, new_rv))
    _check(x, weights, bias, out)

    m_ref = jnp.mean(x, axis=(0, 2, 3))
    v_ref = jnp.mean((x - m_ref.reshape(1, -1, 1, 1)) ** 2, axis=(0, 2, 3))
    num_el = float(N * H * W)
    v_unb = v_ref * num_el / (num_el - 1.0)
    assert jnp.allclose(new_rm, 0.9 * running_mean + 0.1 * m_ref, atol=1e-5, rtol=1e-5)
    assert jnp.allclose(new_rv, 0.9 * running_var + 0.1 * v_unb, atol=1e-5, rtol=1e-5)

    # ---- test 2: two-pass path with a multi-step reduction grid ----
    N, C, H, W = 4, 8, 16, 16
    x = jax.random.normal(k2, (N, C, H, W), dtype=jnp.float32)
    weights = jnp.full((C,), 1.5, dtype=jnp.float32)
    bias = jnp.full((C,), -0.25, dtype=jnp.float32)
    out, _, _ = my_batch_norm_2d(x, weights, bias,
                                 jnp.zeros((C,), jnp.float32),
                                 jnp.ones((C,), jnp.float32),
                                 force_two_pass=True, max_block_bytes=8 * 1024)
    jax.block_until_ready(out)
    _check(x, weights, bias, out)

    # ---- test 3: two-pass path with channel split, folded N tile, chunked acc ----
    N, C, H, W = 4, 16, 32, 32
    x = jax.random.normal(k3, (N, C, H, W), dtype=jnp.float32) * 2.0 + 0.5
    weights = jnp.linspace(0.5, 1.5, C).astype(jnp.float32)
    bias = jnp.linspace(-1.0, 1.0, C).astype(jnp.float32)
    out, _, _ = my_batch_norm_2d(x, weights, bias,
                                 jnp.zeros((C,), jnp.float32),
                                 jnp.ones((C,), jnp.float32),
                                 force_two_pass=True, max_block_bytes=128 * 1024)
    jax.block_until_ready(out)
    _check(x, weights, bias, out)

    print("KERNEL_OK")
</pallas_src>

<mosaic_0001>
module attributes {stable_mosaic.version = 11 : i64} {
  func.func @_fused_kernel(%arg0: i32, %arg1: memref<2x4x256xf32, #tpu.memory_space<vmem>>, %arg2: memref<4x1xf32, #tpu.memory_space<vmem>>, %arg3: memref<4x1xf32, #tpu.memory_space<vmem>>, %arg4: memref<2x4x256xf32, #tpu.memory_space<vmem>>, %arg5: memref<4x1xf32, #tpu.memory_space<vmem>>, %arg6: memref<4x1xf32, #tpu.memory_space<vmem>>, %arg7: memref<4x256xf32, #tpu.memory_space<vmem>>, %arg8: memref<4x256xf32, #tpu.memory_space<vmem>>) attributes {dimension_semantics = [#tpu.dimension_semantics<arbitrary>], iteration_bounds = array<i64: 1>, scalar_prefetch = 0 : i64, scratch_operands = 2 : i64, tpu.core_type = #tpu.core_type<tc>, window_params = [{pipeline_mode = #tpu.pipeline_mode<synchronous>, transform_indices = @transform_0, window_bounds = array<i64: 2, 4, 256>}, {pipeline_mode = #tpu.pipeline_mode<synchronous>, transform_indices = @transform_1, window_bounds = array<i64: 4, 1>}, {pipeline_mode = #tpu.pipeline_mode<synchronous>, transform_indices = @transform_2, window_bounds = array<i64: 4, 1>}, {pipeline_mode = #tpu.pipeline_mode<synchronous>, transform_indices = @transform_3, window_bounds = array<i64: 2, 4, 256>}, {pipeline_mode = #tpu.pipeline_mode<synchronous>, transform_indices = @transform_4, window_bounds = array<i64: 4, 1>}, {pipeline_mode = #tpu.pipeline_mode<synchronous>, transform_indices = @transform_5, window_bounds = array<i64: 4, 1>}]} {
    %c0 = arith.constant 0 : index
    %c0_0 = arith.constant 0 : index
    %c0_1 = arith.constant 0 : index
    %0 = vector.load %arg1[%c0, %c0_0, %c0_1] : memref<2x4x256xf32, #tpu.memory_space<vmem>>, vector<1x4x256xf32>
    %1 = vector.shape_cast %0 : vector<1x4x256xf32> to vector<4x256xf32>
    %c0_2 = arith.constant 0 : index
    %c0_3 = arith.constant 0 : index
    %2 = vector.load %arg7[%c0_2, %c0_3] : memref<4x256xf32, #tpu.memory_space<vmem>>, vector<4x256xf32>
    tpu.vector_store %arg7[%c0_2, %c0_3], %1 {strides = array<i32>} : memref<4x256xf32, #tpu.memory_space<vmem>>, vector<4x256xf32>,
    %3 = arith.mulf %1, %1 : vector<4x256xf32>
    %c0_4 = arith.constant 0 : index
    %c0_5 = arith.constant 0 : index
    %4 = vector.load %arg8[%c0_4, %c0_5] : memref<4x256xf32, #tpu.memory_space<vmem>>, vector<4x256xf32>
    tpu.vector_store %arg8[%c0_4, %c0_5], %3 {strides = array<i32>} : memref<4x256xf32, #tpu.memory_space<vmem>>, vector<4x256xf32>,
    %c1_i32 = arith.constant 1 : i32
    %5 = arith.index_cast %c1_i32 : i32 to index
    %c0_6 = arith.constant 0 : index
    %c0_7 = arith.constant 0 : index
    %6 = vector.load %arg1[%5, %c0_6, %c0_7] : memref<2x4x256xf32, #tpu.memory_space<vmem>>, vector<1x4x256xf32>
    %7 = vector.shape_cast %6 : vector<1x4x256xf32> to vector<4x256xf32>
    %c0_8 = arith.constant 0 : index
    %c0_9 = arith.constant 0 : index
    %8 = vector.load %arg7[%c0_8, %c0_9] : memref<4x256xf32, #tpu.memory_space<vmem>>, vector<4x256xf32>
    %9 = arith.addf %8, %7 : vector<4x256xf32>
    %c0_10 = arith.constant 0 : index
    %c0_11 = arith.constant 0 : index
    %10 = vector.load %arg7[%c0_10, %c0_11] : memref<4x256xf32, #tpu.memory_space<vmem>>, vector<4x256xf32>
    tpu.vector_store %arg7[%c0_10, %c0_11], %9 {strides = array<i32>} : memref<4x256xf32, #tpu.memory_space<vmem>>, vector<4x256xf32>,
    %c0_12 = arith.constant 0 : index
    %c0_13 = arith.constant 0 : index
    %11 = vector.load %arg8[%c0_12, %c0_13] : memref<4x256xf32, #tpu.memory_space<vmem>>, vector<4x256xf32>
    %12 = arith.mulf %7, %7 : vector<4x256xf32>
    %13 = arith.addf %11, %12 : vector<4x256xf32>
    %c0_14 = arith.constant 0 : index
    %c0_15 = arith.constant 0 : index
    %14 = vector.load %arg8[%c0_14, %c0_15] : memref<4x256xf32, #tpu.memory_space<vmem>>, vector<4x256xf32>
    tpu.vector_store %arg8[%c0_14, %c0_15], %13 {strides = array<i32>} : memref<4x256xf32, #tpu.memory_space<vmem>>, vector<4x256xf32>,
    %c1_i32_16 = arith.constant 1 : i32
    %c0_17 = arith.constant 0 : index
    %c0_18 = arith.constant 0 : index
    %15 = vector.load %arg7[%c0_17, %c0_18] : memref<4x256xf32, #tpu.memory_space<vmem>>, vector<4x256xf32>
    %cst = arith.constant dense<0.000000e+00> : vector<4xf32>
    %16 = vector.multi_reduction <add>, %15, %cst [1] : vector<4x256xf32> to vector<4xf32>
    %17 = vector.shape_cast %16 : vector<4xf32> to vector<4x1xf32>
    %c0_19 = arith.constant 0 : index
    %c0_20 = arith.constant 0 : index
    %18 = vector.load %arg8[%c0_19, %c0_20] : memref<4x256xf32, #tpu.memory_space<vmem>>, vector<4x256xf32>
    %cst_21 = arith.constant dense<0.000000e+00> : vector<4xf32>
    %19 = vector.multi_reduction <add>, %18, %cst_21 [1] : vector<4x256xf32> to vector<4xf32>
    %20 = vector.shape_cast %19 : vector<4xf32> to vector<4x1xf32>
    %cst_22 = arith.constant 0.001953125 : f32
    %21 = vector.broadcast %cst_22 : f32 to vector<4x1xf32>
    %22 = arith.mulf %17, %21 : vector<4x1xf32>
    %cst_23 = arith.constant 0.001953125 : f32
    %23 = vector.broadcast %cst_23 : f32 to vector<4x1xf32>
    %24 = arith.mulf %20, %23 : vector<4x1xf32>
    %25 = arith.mulf %22, %22 : vector<4x1xf32>
    %26 = arith.subf %24, %25 : vector<4x1xf32>
    %cst_24 = arith.constant 0.000000e+00 : f32
    %27 = vector.broadcast %cst_24 : f32 to vector<4x1xf32>
    %28 = arith.maximumf %26, %27 : vector<4x1xf32>
    %29 = math.sqrt %28 : vector<4x1xf32>
    %cst_25 = arith.constant 9.99999974E-6 : f32
    %30 = vector.broadcast %cst_25 : f32 to vector<4x1xf32>
    %31 = arith.addf %29, %30 : vector<4x1xf32>
    %c0_26 = arith.constant 0 : index
    %c0_27 = arith.constant 0 : index
    %32 = vector.load %arg2[%c0_26, %c0_27] : memref<4x1xf32, #tpu.memory_space<vmem>>, vector<4x1xf32>
    %33 = arith.divf %32, %31 : vector<4x1xf32>
    %c0_28 = arith.constant 0 : index
    %c0_29 = arith.constant 0 : index
    %34 = vector.load %arg3[%c0_28, %c0_29] : memref<4x1xf32, #tpu.memory_space<vmem>>, vector<4x1xf32>
    %35 = arith.mulf %22, %33 : vector<4x1xf32>
    %36 = arith.subf %34, %35 : vector<4x1xf32>
    %c0_30 = arith.constant 0 : index
    %c0_31 = arith.constant 0 : index
    %37 = vector.load %arg5[%c0_30, %c0_31] : memref<4x1xf32, #tpu.memory_space<vmem>>, vector<4x1xf32>
    tpu.vector_store %arg5[%c0_30, %c0_31], %22 {strides = array<i32>} : memref<4x1xf32, #tpu.memory_space<vmem>>, vector<4x1xf32>,
    %c0_32 = arith.constant 0 : index
    %c0_33 = arith.constant 0 : index
    %38 = vector.load %arg6[%c0_32, %c0_33] : memref<4x1xf32, #tpu.memory_space<vmem>>, vector<4x1xf32>
    tpu.vector_store %arg6[%c0_32, %c0_33], %28 {strides = array<i32>} : memref<4x1xf32, #tpu.memory_space<vmem>>, vector<4x1xf32>,
    %c0_i32 = arith.constant 0 : i32
    %c2_i32 = arith.constant 2 : i32
    %39 = arith.addi %c0_i32, %c2_i32 : i32
    %c1_i32_34 = arith.constant 1 : i32
    scf.for %arg9 = %c0_i32 to %39 step %c1_i32_34  : i32 {
      %40 = arith.index_cast %arg9 : i32 to index
      %c0_36 = arith.constant 0 : index
      %c0_37 = arith.constant 0 : index
      %41 = vector.load %arg1[%40, %c0_36, %c0_37] : memref<2x4x256xf32, #tpu.memory_space<vmem>>, vector<1x4x256xf32>
      %42 = vector.shape_cast %41 : vector<1x4x256xf32> to vector<4x256xf32>
      %43 = vector.broadcast %33 : vector<4x1xf32> to vector<4x256xf32>
      %44 = arith.mulf %42, %43 : vector<4x256xf32>
      %45 = vector.broadcast %36 : vector<4x1xf32> to vector<4x256xf32>
      %46 = arith.addf %44, %45 : vector<4x256xf32>
      %47 = arith.index_cast %arg9 : i32 to index
      %c0_38 = arith.constant 0 : index
      %c0_39 = arith.constant 0 : index
      %48 = vector.load %arg4[%47, %c0_38, %c0_39] : memref<2x4x256xf32, #tpu.memory_space<vmem>>, vector<1x4x256xf32>
      %49 = vector.shape_cast %48 : vector<1x4x256xf32> to vector<4x256xf32>
      %50 = vector.shape_cast %46 : vector<4x256xf32> to vector<1x4x256xf32>
      tpu.vector_store %arg4[%47, %c0_38, %c0_39], %50 {strides = array<i32>} : memref<2x4x256xf32, #tpu.memory_space<vmem>>, vector<1x4x256xf32>,
    }
    %c2_i32_35 = arith.constant 2 : i32
    return
  }
  func.func @transform_0(%arg0: i32) -> (i32, i32, i32) {
    %c0_i32 = arith.constant 0 : i32
    %c0_i32_0 = arith.constant 0 : i32
    %c0_i32_1 = arith.constant 0 : i32
    %c0_i32_2 = arith.constant 0 : i32
    return %c0_i32, %c0_i32_0, %c0_i32_1 : i32, i32, i32
  }
  func.func @transform_1(%arg0: i32) -> (i32, i32) {
    %c0_i32 = arith.constant 0 : i32
    %c0_i32_0 = arith.constant 0 : i32
    %c0_i32_1 = arith.constant 0 : i32
    return %c0_i32, %c0_i32_0 : i32, i32
  }
  func.func @transform_2(%arg0: i32) -> (i32, i32) {
    %c0_i32 = arith.constant 0 : i32
    %c0_i32_0 = arith.constant 0 : i32
    %c0_i32_1 = arith.constant 0 : i32
    return %c0_i32, %c0_i32_0 : i32, i32
  }
  func.func @transform_3(%arg0: i32) -> (i32, i32, i32) {
    %c0_i32 = arith.constant 0 : i32
    %c0_i32_0 = arith.constant 0 : i32
    %c0_i32_1 = arith.constant 0 : i32
    %c0_i32_2 = arith.constant 0 : i32
    return %c0_i32, %c0_i32_0, %c0_i32_1 : i32, i32, i32
  }
  func.func @transform_4(%arg0: i32) -> (i32, i32) {
    %c0_i32 = arith.constant 0 : i32
    %c0_i32_0 = arith.constant 0 : i32
    %c0_i32_1 = arith.constant 0 : i32
    return %c0_i32, %c0_i32_0 : i32, i32
  }
  func.func @transform_5(%arg0: i32) -> (i32, i32) {
    %c0_i32 = arith.constant 0 : i32
    %c0_i32_0 = arith.constant 0 : i32
    %c0_i32_1 = arith.constant 0 : i32
    return %c0_i32, %c0_i32_0 : i32, i32
  }
}

</mosaic_0001>

<llo_original>
// kernel: tpu_custom_call.1
$region0: #{tpu_custom_call.1}
  #allocation0 [shape = 'u32[]', space=smem, size = 0x4, offset = 0x4, fixed_abs, tag = 'smem constant byte address 0x4 - core index']
  #allocation1 [shape = 'u32[72,128]{1,0:T(1,128)}', space=vmem, size = 0x9000, scoped, tag = 'internal scratch']
  #allocation2 [shape = 'f32[4,256]{1,0:T(4,128)}', space=vmem, size = 0x1000, scoped, tag = 'scratch operand']
  #allocation3 [shape = 'f32[4,256]{1,0:T(4,128)}', space=vmem, size = 0x1000, scoped, tag = 'scratch operand']
  %s0 = inlined_call_operand.hbm [shape: f32[2,4,256], index: 0, kind: input, shape index: {}]
  %s1 = inlined_call_operand.vmem [shape: f32[4,1], index: 1, kind: input, shape index: {}]
  %s2 = inlined_call_operand.vmem [shape: f32[4,1], index: 2, kind: input, shape index: {}]
  %s3 = inlined_call_operand.hbm [shape: f32[2,4,256], index: 3, kind: output, shape index: {0}]
  %s4 = inlined_call_operand.vmem [shape: f32[4,1], index: 4, kind: output, shape index: {1}]
  %s5 = inlined_call_operand.vmem [shape: f32[4,1], index: 5, kind: output, shape index: {2}]
  %6 = xla_tuple %s3, %s4, %s5
  %s7 = sld [smem:[#allocation0]]
  $region49: #{tpu_custom_call.1} parent=0
    _
  %s9 = ssub.s32 1, %s7
  %s10 = scalar_select 0, %s9, %s7
  $region1: #{tpu_custom_call.1} parent=0
    #allocation4 [shape = 'u8[8192]{0}', space=vmem, size = 0x2000, scoped, tag = 'input window, operand 0, single buffered']
    #allocation5 [shape = 's32[1]{0}', space=sflag, size = 0x4, scoped, tag = 'scoped memory for tpu_custom_call.1']
    #allocation6 [shape = 's32[1]{0}', space=sflag, size = 0x4, scoped, tag = 'scoped memory for tpu_custom_call.1']
    #allocation7 [shape = 'u8[8192]{0}', space=vmem, size = 0x2000, scoped, tag = 'output window, operand 0, single buffered']
    %11 = vsyncpa [#allocation5], 0
    %12 = vsyncpa [#allocation6], 0
    // Predicated region
    $region2: #{tpu_custom_call.1} parent=1 // pred_check
      _
    $region3: #{tpu_custom_call.1} parent=1 // pred_check_branch
      %14 = sbr.rel (0) target = $region5
    $region4: #{tpu_custom_call.1} parent=1 // pred_region
      %16 = vsyncadd [#allocation5], 0
      %s17 = sshll.u32 %s0, 4
      %s18 = int_to_ptr.hbm [resolvable:$true] %s17
      %s19 = sshll.u32 [#allocation4], 4
      %s20 = int_to_ptr.vmem [resolvable:$true] %s19
      %25 = dma.hbm_to_vmem [thread:$0]  %s18, 256, %s20, [#allocation5], 128, 128, 8
    $region5: #{tpu_custom_call.1} parent=1 // pred_fallthru
      _
    // Predicated region
    $region6: #{tpu_custom_call.1} parent=1 // pred_check
      _
    $region7: #{tpu_custom_call.1} parent=1 // pred_check_branch
      %27 = sbr.rel (0) target = $region9
    $region8: #{tpu_custom_call.1} parent=1 // pred_region
      _
    $region9: #{tpu_custom_call.1} parent=1 // pred_fallthru
      _
    // Predicated region
    $region10: #{tpu_custom_call.1} parent=1 // pred_check
      _
    $region11: #{tpu_custom_call.1} parent=1 // pred_check_branch
      %29 = sbr.rel (0) target = $region13
    $region12: #{tpu_custom_call.1} parent=1 // pred_region
      _
    $region13: #{tpu_custom_call.1} parent=1 // pred_fallthru
      _
    // Predicated region
    $region14: #{tpu_custom_call.1} parent=1 // pred_check
      _
    $region15: #{tpu_custom_call.1} parent=1 // pred_check_branch
      %31 = sbr.rel (0) target = $region17
    $region16: #{tpu_custom_call.1} parent=1 // pred_region
      %33 = dma.done [#allocation5], 256
    $region17: #{tpu_custom_call.1} parent=1 // pred_fallthru
      _
    %v34 = vld [vmem:[#allocation4] sm:$0xff]
    %35 = vst [vmem:[#allocation2] sm:$0xff] %v34
    %v36 = vmul.f32 %v34, %v34
    %37 = vst [vmem:[#allocation3] sm:$0xff] %v36
    %s38 = scalar_lea.vmem [#allocation4], 8
    %v39 = vld [vmem:[%s38] sm:$0xff]
    %v40 = vld [vmem:[#allocation2] sm:$0xff]
    %v41 = vadd.f32 %v40, %v39
    %42 = vst [vmem:[#allocation2] sm:$0xff] %v41
    %v43 = vld [vmem:[#allocation3] sm:$0xff]
    %v44 = vmul.f32 %v39, %v39
    %v45 = vadd.f32 %v43, %v44
    %46 = vst [vmem:[#allocation3] sm:$0xff] %v45
    %v47 = vld [vmem:[#allocation2] sm:$0xff]
    %49 = vst [vmem:[#allocation1] ss:$2 sm:$0xff] %v47
    %v50 = vld.sshfl [vmem:[#allocation1] sm:$0xff pattern:$0x75316420]
    %v51 = vld.sshfl [vmem:[#allocation1 + $0x8] sm:$0xff pattern:$0x75316420]
    %vm54 = vcmask 1043456
    %v55 = vsel %vm54, %v50, 0.0
    %v56 = vsel %vm54, %v51, 0.0
    %v57 = vadd.f32 %v55, %v56
    %58 = vadd.xlane.f32.xlu0 %v57
    %v59 = vpop.xlane.xlu0 %58
    %v60 = vld [vmem:[#allocation3] sm:$0xff]
    %62 = vst [vmem:[#allocation1] ss:$2 sm:$0xff] %v60
    %v63 = vld.sshfl [vmem:[#allocation1] sm:$0xff pattern:$0x75316420]
    %v64 = vld.sshfl [vmem:[#allocation1 + $0x8] sm:$0xff pattern:$0x75316420]
    %v67 = vsel %vm54, %v63, 0.0
    %v68 = vsel %vm54, %v64, 0.0
    %v69 = vadd.f32 %v67, %v68
    %70 = vadd.xlane.f32.xlu0 %v69
    %v71 = vpop.xlane.xlu0 %70
    %v72 = vmul.f32 %v59, 0.001953125
    %v73 = vmul.f32 %v71, 0.001953125
    %v74 = vmul.f32 %v72, %v72
    %v75 = vsub.f32 %v73, %v74
    %v76 = vmax.f32 %v75, 0.0
    %v77 = vrsqrt.pop %v76
    %v78 = vmul.f32 %v77, %v76
    %v79 = vmul.f32 %v78, %v77
    %v80 = vmul.f32 0.5, %v79
    %v81 = vsub.f32 1.5, %v80
    %v82 = vmul.f32 %v77, %v81
    %v83 = vmul.f32 %v76, %v82
    %vm84 = vcmp.eq.f32.partialorder %v76, inf
    %v85 = vsel %vm84, %v76, %v83
    %vm86 = vcmp.eq.f32.partialorder %v76, 0.0
    %v87 = vand.u32 %v76, 2147483648
    %v88 = vsel %vm86, %v87, %v85
    %v89 = vadd.f32 %v88, 1e-05
    %v90 = vld [vmem:[%s1] sm:$0xf]
    %v91 = vrcp.pop %v89
    %v92 = vmul.f32 %v89, %v91
    %v93 = vsub.f32 1.0, %v92
    %v94 = vmul.f32 %v91, %v93
    %v95 = vadd.f32 %v91, %v94
    %vm96 = vweird.f32 %v89
    %vm97 = vweird.f32 %v91
    %vm98 = vmor %vm96, %vm97
    %v99 = vsel %vm98, %v91, %v95
    %v100 = vand.u32 2147483647, %v89
    %vm101 = vcmp.eq.f32.partialorder %v100, 8.507059e+37
    %v102 = vand.u32 %v89, 2147483648
    %v103 = vor.u32 1.1754944e-38, %v102
    %v104 = vsel %vm101, %v103, %v99
    %v105 = vmul.f32 %v90, %v104
    %v106 = vld [vmem:[%s2] sm:$0xf]
    %v107 = vmul.f32 %v72, %v105
    %v108 = vsub.f32 %v106, %v107
    %vm109 = vcmask 3072
    %110 = vst.msk [vmem:[%s4] sm:$0xf] %vm109, %v72
    %111 = vst.msk [vmem:[%s5] sm:$0xf] %vm109, %v76
    loop: start=0, step=1, limit=2
    $region18: #{tpu_custom_call.1} parent=1 // loop_pre_header
      _
    $region19: #{tpu_custom_call.1} parent=1 // loop_header
      %s113 = sphi 0, %s117
      %p114 = scmp.ge.s32.totalorder %s113, 2
    $region20: #{tpu_custom_call.1} parent=1 // loop_header_branch
      %116 = sbr.rel (%p114) target = $region24
    $region21: #{tpu_custom_call.1} parent=1 // loop_body
      %s118 = smul.u32 %s113, 2
      %s119 = smul.addr %s118, 4
      %s120 = scalar_lea.vmem [#allocation4], %s119
      %v121 = vld [vmem:[%s120] sm:$0xff]
      %123 = vset.pattern.permute.xlu0 0
      %124 = vperm.xlu0 %123, %v105
      %v125 = vpop.permute.xlu0 %124
      %v127 = vunpack.c.l.s4 839922192
      %v128 = vunpack.c.0.s8 %v127
      %v129 = vperm.slane %v125, %v128
      %v131 = vmul.f32 %v121, %v129
      %133 = vset.pattern.permute.xlu0 0
      %134 = vperm.xlu0 %133, %v108
      %v135 = vpop.permute.xlu0 %134
      %v137 = vunpack.c.l.s4 839922192
      %v138 = vunpack.c.0.s8 %v137
      %v139 = vperm.slane %v135, %v138
      %v141 = vadd.f32 %v131, %v139
      %s142 = smul.addr %s118, 4
      %s143 = scalar_lea.vmem [#allocation7], %s142
      %144 = vst [vmem:[%s143] sm:$0xff] %v141
    $region22: #{tpu_custom_call.1} parent=1 // loop_footer
      %s117 = sadd.s32 1, %s113
    $region23: #{tpu_custom_call.1} parent=1 // loop_footer_branch
      %112 = sbr.rel target = $region19
    $region24: #{tpu_custom_call.1} parent=1 // loop_exit
      _
    // Predicated region
    $region25: #{tpu_custom_call.1} parent=1 // pred_check
      _
    $region26: #{tpu_custom_call.1} parent=1 // pred_check_branch
      %146 = sbr.rel (0) target = $region28
    $region27: #{tpu_custom_call.1} parent=1 // pred_region
      %148 = vsyncadd [#allocation6], 0
      %s149 = sshll.u32 [#allocation7], 4
      %s150 = int_to_ptr.vmem [resolvable:$true] %s149
      %s151 = sshll.u32 %s3, 4
      %s152 = int_to_ptr.hbm [resolvable:$true] %s151
      %157 = dma.vmem_to_hbm [thread:$0]  %s150, 256, %s152, [#allocation6], 128, 128, 8
    $region28: #{tpu_custom_call.1} parent=1 // pred_fallthru
      _
    // Predicated region
    $region29: #{tpu_custom_call.1} parent=1 // pred_check
      _
    $region30: #{tpu_custom_call.1} parent=1 // pred_check_branch
      %159 = sbr.rel (0) target = $region32
    $region31: #{tpu_custom_call.1} parent=1 // pred_region
      _
    $region32: #{tpu_custom_call.1} parent=1 // pred_fallthru
      _
    // Predicated region
    $region33: #{tpu_custom_call.1} parent=1 // pred_check
      _
    $region34: #{tpu_custom_call.1} parent=1 // pred_check_branch
      %161 = sbr.rel (0) target = $region36
    $region35: #{tpu_custom_call.1} parent=1 // pred_region
      _
    $region36: #{tpu_custom_call.1} parent=1 // pred_fallthru
      _
    // Predicated region
    $region37: #{tpu_custom_call.1} parent=1 // pred_check
      _
    $region38: #{tpu_custom_call.1} parent=1 // pred_check_branch
      %163 = sbr.rel (0) target = $region40
    $region39: #{tpu_custom_call.1} parent=1 // pred_region
      %165 = dma.done [#allocation6], 256
    $region40: #{tpu_custom_call.1} parent=1 // pred_fallthru
      _
    // Predicated region
    $region41: #{tpu_custom_call.1} parent=1 // pred_check
      _
    $region42: #{tpu_custom_call.1} parent=1 // pred_check_branch
      %167 = sbr.rel (0) target = $region44
    $region43: #{tpu_custom_call.1} parent=1 // pred_region
      _
    $region44: #{tpu_custom_call.1} parent=1 // pred_fallthru
      _
    // Predicated region
    $region45: #{tpu_custom_call.1} parent=1 // pred_check
      _
    $region46: #{tpu_custom_call.1} parent=1 // pred_check_branch
      %169 = sbr.rel (0) target = $region48
    $region47: #{tpu_custom_call.1} parent=1 // pred_region
      _
    $region48: #{tpu_custom_call.1} parent=1 // pred_fallthru
      _
    %170 = vsyncpa [#allocation5], 1
    %171 = vsyncpa [#allocation6], 1

</llo_original>
